<compile_context>
chip_gen: v7x
topology: tpu7x:2x2x1
jax: 0.10.0
libtpu: 0.0.40
codegen_flags: <defaults>
</compile_context>

<pallas_src>
import functools
import math

import numpy as np
import jax
import jax.numpy as jnp
from jax.experimental import pallas as pl
from jax.experimental.pallas import tpu as pltpu


def _round_up(x, m):
    return (x + m - 1) // m * m


# ---------------------------------------------------------------------------
# Kernel A: per-node feature transform + attention-score matmul (row grid)
#   xw     = x @ W                [TILE_I, H*Cp]  (written as bf16)
#   scores = xw @ A_blockdiag     [TILE_I, 2H]    cols 0..H-1 = a_src, H.. = a_dst
# ---------------------------------------------------------------------------
def _gat_feat_kernel(x_ref, w_ref, attn_ref, xw_ref, sc_ref):
    xw = jnp.dot(x_ref[...], w_ref[...], preferred_element_type=jnp.float32)
    sc_ref[...] = jnp.dot(xw, attn_ref[...], preferred_element_type=jnp.float32)
    xw_ref[...] = xw.astype(xw_ref.dtype)


def gat_features(x, w_pad, attn_mat, *, heads, cp, tile_i):
    n_pad, f_in = x.shape
    hc = heads * cp
    return pl.pallas_call(
        _gat_feat_kernel,
        out_shape=(jax.ShapeDtypeStruct((n_pad, hc), jnp.bfloat16),
                   jax.ShapeDtypeStruct((n_pad, 2 * heads), jnp.float32)),
        grid_spec=pltpu.PrefetchScalarGridSpec(
            num_scalar_prefetch=0,
            grid=(n_pad // tile_i,),
            in_specs=[
                pl.BlockSpec((tile_i, f_in), lambda i: (i, 0)),
                pl.BlockSpec((f_in, hc), lambda i: (0, 0)),
                pl.BlockSpec((hc, 2 * heads), lambda i: (0, 0)),
            ],
            out_specs=[
                pl.BlockSpec((tile_i, hc), lambda i: (i, 0)),
                pl.BlockSpec((tile_i, 2 * heads), lambda i: (i, 0)),
            ]),
        compiler_params=pltpu.CompilerParams(
            dimension_semantics=("parallel",)),
    )(x, w_pad, attn_mat)


# ---------------------------------------------------------------------------
# Kernel B: block-sparse masked edge softmax + neighbor aggregation.
#   grid = (i row tiles, nj = max non-empty column tiles per row).
#   Scalar-prefetched table remaps jj -> real column tile; cnt[i] gates work.
#   Fixed-max softmax: no online max, no rescaling; denominator via MXU.
# ---------------------------------------------------------------------------
def _gat_attn_kernel(tbl_ref, cnt_ref, dstm_ref, srct_ref, xw_ref, adj_ref,
                     bias_ref, out_ref, l_ref, acc_ref, *, heads, cp,
                     neg_slope, tile_j, xw_resident):
    i = pl.program_id(0)
    jj = pl.program_id(1)
    nj = pl.num_programs(1)

    @pl.when(jj == 0)
    def _init():
        l_ref[...] = jnp.zeros_like(l_ref)
        acc_ref[...] = jnp.zeros_like(acc_ref)

    # Block-sparse skip: only the first cnt[i] steps of this row carry edges.
    @pl.when(jj < cnt_ref[i])
    def _compute():
        adjb = adj_ref[...]                                   # [TI,TJ] bf16 {0,1}
        if xw_resident:
            jb = tbl_ref[i * nj + jj]
            start = pl.multiple_of(jb * tile_j, tile_j)
            xw_j = xw_ref[pl.ds(start, tile_j), :]            # [TJ, H*Cp] bf16
        else:
            xw_j = xw_ref[...]                                # [TJ, H*Cp] bf16
        ones_col = jnp.ones((tile_j, 1), jnp.bfloat16)

        agg_parts = []
        sum_parts = []
        for h in range(heads):                                # static unroll
            a_dst = dstm_ref[:, h:h + 1]                      # [TI,1]
            m_row = dstm_ref[:, heads + h:heads + h + 1]      # [TI,1] fixed max
            a_src = srct_ref[h:h + 1, :]                      # [1,TJ]
            s = a_dst + a_src                                 # rank-1 scores
            s = jnp.maximum(s, neg_slope * s)                 # LeakyReLU (slope<1)
            # s - m_row <= 0 by construction -> exp never overflows; non-edges
            # are zeroed by a single bf16 multiply with the 0/1 adjacency tile.
            p = jnp.exp(s - m_row).astype(jnp.bfloat16) * adjb
            agg_parts.append(jnp.dot(p, xw_j[:, h * cp:(h + 1) * cp],
                                     preferred_element_type=jnp.float32))
            # softmax denominator on the MXU (row-sum = p @ ones), not the XLU
            sum_parts.append(jnp.dot(p, ones_col,
                                     preferred_element_type=jnp.float32))
        agg = agg_parts[0] if heads == 1 else jnp.concatenate(agg_parts, axis=1)
        den = sum_parts[0] if heads == 1 else jnp.concatenate(sum_parts, axis=1)
        acc_ref[...] += agg                                   # full-width RMW
        l_ref[...] += den

    @pl.when(jj == nj - 1)
    def _finalize():
        # clamp guards against full exp-underflow rows (self-loop normally > 0)
        inv_l = pl.reciprocal(jnp.maximum(l_ref[...], 1e-30), approx=True)
        acc = acc_ref[...]
        outs = [acc[:, h * cp:(h + 1) * cp] * inv_l[:, h:h + 1]
                for h in range(heads)]
        res = outs[0] if heads == 1 else jnp.concatenate(outs, axis=1)
        out_ref[...] = res + bias_ref[...]                    # single dense store


def gat_aggregate(table, counts, dstm, src_t, xw, adj, bias_p, *, heads, cp,
                  neg_slope, tile_i, tile_j, nj, xw_resident):
    n_pad = adj.shape[0]
    hc = heads * cp
    kernel = functools.partial(_gat_attn_kernel, heads=heads, cp=cp,
                               neg_slope=neg_slope, tile_j=tile_j,
                               xw_resident=xw_resident)

    def row_map(i, j, tbl, cnt):
        return (i, 0)

    def col_map(i, j, tbl, cnt):             # a_src of the mapped column tile
        return (0, tbl[i * nj + j])

    def adj_map(i, j, tbl, cnt):
        return (i, tbl[i * nj + j])

    def xw_map_tiled(i, j, tbl, cnt):
        return (tbl[i * nj + j], 0)

    def const_map(i, j, tbl, cnt):
        return (0, 0)

    xw_spec = (pl.BlockSpec((n_pad, hc), const_map) if xw_resident
               else pl.BlockSpec((tile_j, hc), xw_map_tiled))

    return pl.pallas_call(
        kernel,
        out_shape=jax.ShapeDtypeStruct((n_pad, hc), jnp.float32),
        grid_spec=pltpu.PrefetchScalarGridSpec(
            num_scalar_prefetch=2,
            grid=(n_pad // tile_i, nj),
            in_specs=[
                pl.BlockSpec((tile_i, 2 * heads), row_map),   # [a_dst | M]
                pl.BlockSpec((heads, tile_j), col_map),       # a_src (pre-transposed)
                xw_spec,                                      # transformed features
                pl.BlockSpec((tile_i, tile_j), adj_map),      # adjacency tile (bf16)
                pl.BlockSpec((1, hc), const_map),             # bias
            ],
            out_specs=pl.BlockSpec((tile_i, hc), row_map),
            scratch_shapes=[
                pltpu.VMEM((tile_i, heads), jnp.float32),     # softmax denominator
                pltpu.VMEM((tile_i, hc), jnp.float32),        # unnormalized output
            ]),
        compiler_params=pltpu.CompilerParams(
            dimension_semantics=("parallel", "arbitrary"),
            vmem_limit_bytes=48 * 1024 * 1024),
    )(table, counts, dstm, src_t, xw, adj, bias_p)


# ---------------------------------------------------------------------------
# Graph / parameter glue (plain JAX / numpy)
# ---------------------------------------------------------------------------
def build_dense_adjacency(edge_index, n_pad):
    """adj[i, j] = 1 iff edge j -> i; self-loops on every (incl. padded) row.
    Stored bf16: halves the O(N^2) stream and needs no in-kernel cast."""
    src, dst = edge_index[0], edge_index[1]
    adj = jnp.zeros((n_pad, n_pad), jnp.float32).at[dst, src].set(1.0)
    adj = jnp.maximum(adj, jnp.eye(n_pad, dtype=jnp.float32))
    return adj.astype(jnp.bfloat16)


def build_tile_schedule(edge_index, n_pad, tile_i, tile_j):
    """Block-sparse schedule: for each row tile, the column tiles holding at
    least one edge (>= 1 thanks to self-loops).  Padded slots repeat the last
    valid tile so their DMAs dedup and their compute is skipped via cnt.
    Returned flattened (1D) to keep the SMEM footprint small."""
    gi, gj = n_pad // tile_i, n_pad // tile_j
    src = np.asarray(jax.device_get(edge_index[0]))
    dst = np.asarray(jax.device_get(edge_index[1]))
    nz = np.zeros((gi, gj), dtype=bool)
    nz[dst // tile_i, src // tile_j] = True
    diag = np.arange(n_pad)
    nz[diag // tile_i, diag // tile_j] = True                 # self-loops
    counts = nz.sum(axis=1).astype(np.int32)
    nj = int(counts.max())
    table = np.zeros((gi, nj), dtype=np.int32)
    for i in range(gi):
        js = np.nonzero(nz[i])[0]
        table[i, :len(js)] = js
        table[i, len(js):] = js[-1]
    return jnp.asarray(table.reshape(-1)), jnp.asarray(counts), nj


def _pad_per_head(a, heads, c, cp):
    """Zero-pad the last (concat) axis from heads*c to heads*cp, per head."""
    if cp == c:
        return a
    lead = a.shape[:-1]
    a = a.reshape(lead + (heads, c))
    pad = [(0, 0)] * (a.ndim - 1) + [(0, cp - c)]
    a = jnp.pad(a, pad)
    return a.reshape(lead + (heads * cp,))


def _build_attn_matrix(att_src_p, att_dst_p, heads, cp):
    """Block-diagonal [H*Cp, 2H] matrix so xw @ A gives all per-head
    (a_src, a_dst) dot products in a single MXU matmul."""
    a = jnp.zeros((heads * cp, 2 * heads), jnp.float32)
    for h in range(heads):
        a = a.at[h * cp:(h + 1) * cp, h].set(att_src_p[h])
        a = a.at[h * cp:(h + 1) * cp, heads + h].set(att_dst_p[h])
    return a


def gat_layer(h, adj, table, counts, nj, lp, *, tile_i, tile_j, neg_slope=0.2):
    heads, c = lp["heads"], lp["out_ch"]
    if heads == 1:
        cp = c                       # full-width lane blocks; no 128-pad inflation
    else:
        step = 128 // math.gcd(heads, 128)
        cp = _round_up(c, step)      # heads*cp is a multiple of 128 lanes
    hc = heads * cp
    n_pad = h.shape[0]

    w_p = _pad_per_head(lp["w"], heads, c, cp)                    # [F_in, H*Cp]
    bias_p = _pad_per_head(lp["bias"], heads, c, cp)              # [1, H*Cp]
    att_src_p = jnp.pad(lp["att_src"], ((0, 0), (0, cp - c)))     # [H, Cp]
    att_dst_p = jnp.pad(lp["att_dst"], ((0, 0), (0, cp - c)))     # [H, Cp]
    attn_mat = _build_attn_matrix(att_src_p, att_dst_p, heads, cp)

    xw, sc = gat_features(h, w_p, attn_mat, heads=heads, cp=cp, tile_i=tile_i)
    a_src = sc[:, :heads]                                         # [Np, H]
    a_dst = sc[:, heads:]                                         # [Np, H]
    # Fixed-max softmax: M[i,h] = leaky(a_dst[i,h] + max_j a_src[j,h]) upper-
    # bounds every edge score -> no online max / rescaling in the kernel.
    m_bound = a_dst + jnp.max(a_src, axis=0, keepdims=True)
    m_bound = jnp.maximum(m_bound, neg_slope * m_bound)           # LeakyReLU
    dstm = jnp.concatenate([a_dst, m_bound], axis=1)              # [Np, 2H]
    src_t = jnp.transpose(a_src)                                  # [H, Np]

    # keep xw resident in VMEM when it (double-buffered) comfortably fits
    xw_resident = (2 * n_pad * hc * 2) <= (16 << 20)

    out = gat_aggregate(table, counts, dstm, src_t, xw, adj, bias_p,
                        heads=heads, cp=cp, neg_slope=neg_slope,
                        tile_i=tile_i, tile_j=tile_j, nj=nj,
                        xw_resident=xw_resident)
    if cp != c:  # drop per-head lane padding
        out = out.reshape(n_pad, heads, cp)[:, :, :c].reshape(n_pad, heads * c)
    return out


def magic_gat_forward(x, edge_index, params, *, tile=512):
    """MagicGAT.forward (eval mode, residual=False, activation=None)."""
    n, f_in = x.shape
    t = min(tile, _round_up(n, 128))
    n_pad = _round_up(n, t)
    tile_i, tile_j = t, t
    if n_pad == tile_i and n_pad >= 256:
        tile_i = n_pad // 2          # >= 2 row tiles so both v7x cores get work
    adj = build_dense_adjacency(edge_index, n_pad)
    table, counts, nj = build_tile_schedule(edge_index, n_pad, tile_i, tile_j)
    h = jnp.zeros((n_pad, f_in), jnp.float32).at[:n].set(x)
    for lp in params["layers"]:
        # feat dropout (p=0.1) is identity in eval mode
        h = gat_layer(h, adj, table, counts, nj, lp,
                      tile_i=tile_i, tile_j=tile_j, neg_slope=0.2)
    # is_decoder=False -> dict output; drop padded rows
    return {"h": h[:n]}


def init_params(key, in_dim, hid_dim, out_dim, n_heads):
    """Deterministic glorot-style init; n_layers=2, heads concatenated."""
    def glorot(k, shape):
        fan_in, fan_out = shape[0], shape[-1]
        scale = jnp.sqrt(6.0 / (fan_in + fan_out))
        return jax.random.uniform(k, shape, jnp.float32, -scale, scale)

    k = jax.random.split(key, 6)
    layer0 = {
        "w": glorot(k[0], (in_dim, n_heads * hid_dim)),
        "att_src": glorot(k[1], (n_heads, hid_dim)),
        "att_dst": glorot(k[2], (n_heads, hid_dim)),
        "bias": jnp.zeros((1, n_heads * hid_dim), jnp.float32),
        "heads": n_heads,
        "out_ch": hid_dim,
    }
    layer1 = {
        "w": glorot(k[3], (n_heads * hid_dim, out_dim)),
        "att_src": glorot(k[4], (1, out_dim)),
        "att_dst": glorot(k[5], (1, out_dim)),
        "bias": jnp.zeros((1, out_dim), jnp.float32),
        "heads": 1,
        "out_ch": out_dim,
    }
    # TODO(synk): self.last_linear is only used when residual=True and is
    # therefore not instantiated here (residual=False in this config).
    return {"layers": [layer0, layer1]}


if __name__ == "__main__":
    key = jax.random.PRNGKey(0)
    k_x, k_src, k_dst, k_params = jax.random.split(key, 4)

    # Small deterministic graph.
    num_nodes, num_edges = 64, 128
    in_dim, hid_dim, out_dim, n_heads = 16, 32, 24, 4

    x = jax.random.normal(k_x, (num_nodes, in_dim), jnp.float32)
    src = jax.random.randint(k_src, (num_edges,), 0, num_nodes, jnp.int32)
    dst = jax.random.randint(k_dst, (num_edges,), 0, num_nodes, jnp.int32)
    edge_index = jnp.stack([src, dst], axis=0)                 # [2, E]

    params = init_params(k_params, in_dim, hid_dim, out_dim, n_heads)

    out = magic_gat_forward(x, edge_index, params)
    h = jax.block_until_ready(out["h"])
    assert h.shape == (num_nodes, out_dim)
    assert bool(jnp.all(jnp.isfinite(h)))
    print("KERNEL_OK")
</pallas_src>

<mosaic_0001>
module attributes {stable_mosaic.version = 11 : i64} {
  func.func @_gat_feat_kernel(%arg0: i32, %arg1: memref<128x16xf32, #tpu.memory_space<vmem>>, %arg2: memref<16x128xf32, #tpu.memory_space<vmem>>, %arg3: memref<128x8xf32, #tpu.memory_space<vmem>>, %arg4: memref<128x128xbf16, #tpu.memory_space<vmem>>, %arg5: memref<128x8xf32, #tpu.memory_space<vmem>>) attributes {dimension_semantics = [#tpu.dimension_semantics<parallel>], iteration_bounds = array<i64: 1>, scalar_prefetch = 0 : i64, scratch_operands = 0 : i64, tpu.core_type = #tpu.core_type<tc>, window_params = [{transform_indices = @transform_0, window_bounds = array<i64: 128, 16>}, {pipeline_mode = #tpu.pipeline_mode<synchronous>, transform_indices = @transform_1, window_bounds = array<i64: 16, 128>}, {pipeline_mode = #tpu.pipeline_mode<synchronous>, transform_indices = @transform_2, window_bounds = array<i64: 128, 8>}, {transform_indices = @transform_3, window_bounds = array<i64: 128, 128>}, {transform_indices = @transform_4, window_bounds = array<i64: 128, 8>}]} {
    %c0 = arith.constant 0 : index
    %c0_0 = arith.constant 0 : index
    %0 = vector.load %arg1[%c0, %c0_0] : memref<128x16xf32, #tpu.memory_space<vmem>>, vector<128x16xf32>
    %c0_1 = arith.constant 0 : index
    %c0_2 = arith.constant 0 : index
    %1 = vector.load %arg2[%c0_1, %c0_2] : memref<16x128xf32, #tpu.memory_space<vmem>>, vector<16x128xf32>
    %cst = arith.constant dense<0.000000e+00> : vector<128x128xf32>
    %2 = tpu.matmul %0, %1, %cst {dimension_numbers = #tpu.dot_dimension_numbers<[1], [0], [0], [1], [0, 0, 1, 1], [], []>} : vector<128x16xf32>, vector<16x128xf32>, vector<128x128xf32> -> vector<128x128xf32>
    %c0_3 = arith.constant 0 : index
    %c0_4 = arith.constant 0 : index
    %3 = vector.load %arg3[%c0_3, %c0_4] : memref<128x8xf32, #tpu.memory_space<vmem>>, vector<128x8xf32>
    %cst_5 = arith.constant dense<0.000000e+00> : vector<128x8xf32>
    %4 = tpu.matmul %2, %3, %cst_5 {dimension_numbers = #tpu.dot_dimension_numbers<[1], [0], [0], [1], [0, 0, 1, 1], [], []>} : vector<128x128xf32>, vector<128x8xf32>, vector<128x8xf32> -> vector<128x8xf32>
    %c0_6 = arith.constant 0 : index
    %c0_7 = arith.constant 0 : index
    %5 = vector.load %arg5[%c0_6, %c0_7] : memref<128x8xf32, #tpu.memory_space<vmem>>, vector<128x8xf32>
    tpu.vector_store %arg5[%c0_6, %c0_7], %4 {strides = array<i32>} : memref<128x8xf32, #tpu.memory_space<vmem>>, vector<128x8xf32>,
    %6 = arith.truncf %2 : vector<128x128xf32> to vector<128x128xbf16>
    %c0_8 = arith.constant 0 : index
    %c0_9 = arith.constant 0 : index
    %7 = vector.load %arg4[%c0_8, %c0_9] : memref<128x128xbf16, #tpu.memory_space<vmem>>, vector<128x128xbf16>
    tpu.vector_store %arg4[%c0_8, %c0_9], %6 {strides = array<i32>} : memref<128x128xbf16, #tpu.memory_space<vmem>>, vector<128x128xbf16>,
    return
  }
  func.func @transform_0(%arg0: i32) -> (i32, i32) {
    %c0_i32 = arith.constant 0 : i32
    %c0_i32_0 = arith.constant 0 : i32
    return %arg0, %c0_i32 : i32, i32
  }
  func.func @transform_1(%arg0: i32) -> (i32, i32) {
    %c0_i32 = arith.constant 0 : i32
    %c0_i32_0 = arith.constant 0 : i32
    %c0_i32_1 = arith.constant 0 : i32
    return %c0_i32, %c0_i32_0 : i32, i32
  }
  func.func @transform_2(%arg0: i32) -> (i32, i32) {
    %c0_i32 = arith.constant 0 : i32
    %c0_i32_0 = arith.constant 0 : i32
    %c0_i32_1 = arith.constant 0 : i32
    return %c0_i32, %c0_i32_0 : i32, i32
  }
  func.func @transform_3(%arg0: i32) -> (i32, i32) {
    %c0_i32 = arith.constant 0 : i32
    %c0_i32_0 = arith.constant 0 : i32
    return %arg0, %c0_i32 : i32, i32
  }
  func.func @transform_4(%arg0: i32) -> (i32, i32) {
    %c0_i32 = arith.constant 0 : i32
    %c0_i32_0 = arith.constant 0 : i32
    return %arg0, %c0_i32 : i32, i32
  }
}

</mosaic_0001>

<llo_original>
// kernel: tpu_custom_call.1
$region0: #{tpu_custom_call.1}
  #allocation0 [shape = 'u32[]', space=smem, size = 0x4, offset = 0x4, fixed_abs, tag = 'smem constant byte address 0x4 - core index']
  #allocation1 [shape = 'u32[144,128]{1,0:T(1,128)}', space=vmem, size = 0x12000, scoped, tag = 'internal scratch']
  %s0 = inlined_call_operand.vmem [shape: f32[128,16], index: 0, kind: input, shape index: {}]
  %s1 = inlined_call_operand.vmem [shape: f32[16,128], index: 1, kind: input, shape index: {}]
  %s2 = inlined_call_operand.vmem [shape: f32[128,8], index: 2, kind: input, shape index: {}]
  %s3 = inlined_call_operand.hbm [shape: bf16[128,128], index: 3, kind: output, shape index: {0}]
  %s4 = inlined_call_operand.vmem [shape: f32[128,8], index: 4, kind: output, shape index: {1}]
  %5 = xla_tuple %s3, %s4
  %s6 = sld [smem:[#allocation0]]
  $region30: #{tpu_custom_call.1} parent=0
    _
  %s8 = ssub.s32 1, %s6
  %s9 = scalar_select 0, %s8, %s6
  $region1: #{tpu_custom_call.1} parent=0
    #allocation2 [shape = 'u8[32768]{0}', space=vmem, size = 0x8000, scoped, tag = 'output window, operand 0, single buffered']
    #allocation3 [shape = 's32[1]{0}', space=sflag, size = 0x4, scoped, tag = 'scoped memory for tpu_custom_call.1']
    %10 = vsyncpa [#allocation3], 0
    // Predicated region
    $region2: #{tpu_custom_call.1} parent=1 // pred_check
      _
    $region3: #{tpu_custom_call.1} parent=1 // pred_check_branch
      %12 = sbr.rel (0) target = $region5
    $region4: #{tpu_custom_call.1} parent=1 // pred_region
      _
    $region5: #{tpu_custom_call.1} parent=1 // pred_fallthru
      _
    // Predicated region
    $region6: #{tpu_custom_call.1} parent=1 // pred_check
      _
    $region7: #{tpu_custom_call.1} parent=1 // pred_check_branch
      %14 = sbr.rel (0) target = $region9
    $region8: #{tpu_custom_call.1} parent=1 // pred_region
      _
    $region9: #{tpu_custom_call.1} parent=1 // pred_fallthru
      _
    // Predicated region
    $region10: #{tpu_custom_call.1} parent=1 // pred_check
      _
    $region11: #{tpu_custom_call.1} parent=1 // pred_check_branch
      %16 = sbr.rel (0) target = $region13
    $region12: #{tpu_custom_call.1} parent=1 // pred_region
      _
    $region13: #{tpu_custom_call.1} parent=1 // pred_fallthru
      _
    %v17 = vld [vmem:[%s0] sm:$0xff]
    %v18 = vld [vmem:[%s0 + $0x8] sm:$0xff]
    %v19 = vld [vmem:[%s0 + $0x10] sm:$0xff]
    %v20 = vld [vmem:[%s0 + $0x18] sm:$0xff]
    %v21 = vld [vmem:[%s0 + $0x20] sm:$0xff]
    %v22 = vld [vmem:[%s0 + $0x28] sm:$0xff]
    %v23 = vld [vmem:[%s0 + $0x30] sm:$0xff]
    %v24 = vld [vmem:[%s0 + $0x38] sm:$0xff]
    %v25 = vld [vmem:[%s0 + $0x40] sm:$0xff]
    %v26 = vld [vmem:[%s0 + $0x48] sm:$0xff]
    %v27 = vld [vmem:[%s0 + $0x50] sm:$0xff]
    %v28 = vld [vmem:[%s0 + $0x58] sm:$0xff]
    %v29 = vld [vmem:[%s0 + $0x60] sm:$0xff]
    %v30 = vld [vmem:[%s0 + $0x68] sm:$0xff]
    %v31 = vld [vmem:[%s0 + $0x70] sm:$0xff]
    %v32 = vld [vmem:[%s0 + $0x78] sm:$0xff]
    %v33 = vld [vmem:[%s1] sm:$0xff]
    %v34 = vld [vmem:[%s1 + $0x8] sm:$0xff]
    %vm35 = vcmask 130048
    %v37 = vsel %vm35, %v17, 0
    %v40 = vsel %vm35, %v18, 0
    %v43 = vsel %vm35, %v19, 0
    %v46 = vsel %vm35, %v20, 0
    %v49 = vsel %vm35, %v21, 0
    %v52 = vsel %vm35, %v22, 0
    %v55 = vsel %vm35, %v23, 0
    %v58 = vsel %vm35, %v24, 0
    %v61 = vsel %vm35, %v25, 0
    %v64 = vsel %vm35, %v26, 0
    %v67 = vsel %vm35, %v27, 0
    %v70 = vsel %vm35, %v28, 0
    %v73 = vsel %vm35, %v29, 0
    %v76 = vsel %vm35, %v30, 0
    %v79 = vsel %vm35, %v31, 0
    %v82 = vsel %vm35, %v32, 0
    %84 = vmatprep.subr.mxu0 0.0
    %85 = vmatpush1.msra.mxu0 %v33
    %86 = vmatprep.subr.mxu0 0.0
    %87 = vmatpush1.msra.mxu0 %v34
    %88 = vmatprep.subr.mxu0 0.0
    %89 = vmatpush1.msra.mxu0 0.0
    %90 = vmatprep.subr.mxu0 0.0
    %91 = vmatpush1.msra.mxu0 0.0
    %92 = vmatprep.subr.mxu0 0.0
    %93 = vmatpush1.msra.mxu0 0.0
    %94 = vmatprep.subr.mxu0 0.0
    %95 = vmatpush1.msra.mxu0 0.0
    %96 = vmatprep.subr.mxu0 0.0
    %97 = vmatpush1.msra.mxu0 0.0
    %98 = vmatprep.subr.mxu0 0.0
    %99 = vmatpush1.msra.mxu0 0.0
    %100 = vmatprep.subr.mxu0 0.0
    %101 = vmatpush1.msra.mxu0 0.0
    %102 = vmatprep.subr.mxu0 0.0
    %103 = vmatpush1.msra.mxu0 0.0
    %104 = vmatprep.subr.mxu0 0.0
    %105 = vmatpush1.msra.mxu0 0.0
    %106 = vmatprep.subr.mxu0 0.0
    %107 = vmatpush1.msra.mxu0 0.0
    %108 = vmatprep.subr.mxu0 0.0
    %109 = vmatpush1.msra.mxu0 0.0
    %110 = vmatprep.subr.mxu0 0.0
    %111 = vmatpush1.msra.mxu0 0.0
    %112 = vmatprep.subr.mxu0 0.0
    %113 = vmatpush1.msra.mxu0 0.0
    %114 = vmatprep.subr.mxu0 0.0
    %115 = vmatpush1.msra.mxu0 0.0
    %116 = vmatprep.subr.mxu0 0.0
    %117 = vmatpush1.msra.mxu0 0.0
    %118 = vmatprep.subr.mxu0 0.0
    %119 = vmatpush1.msra.mxu0 0.0
    %120 = vmatprep.subr.mxu0 0.0
    %121 = vmatpush1.msra.mxu0 0.0
    %122 = vmatprep.subr.mxu0 0.0
    %123 = vmatpush1.msra.mxu0 0.0
    %124 = vmatprep.subr.mxu0 0.0
    %125 = vmatpush1.msra.mxu0 0.0
    %126 = vmatprep.subr.mxu0 0.0
    %127 = vmatpush1.msra.mxu0 0.0
    %128 = vmatprep.subr.mxu0 0.0
    %129 = vmatpush1.msra.mxu0 0.0
    %130 = vmatprep.subr.mxu0 0.0
    %131 = vmatpush1.msra.mxu0 0.0
    %132 = vmatprep.subr.mxu0 0.0
    %133 = vmatpush1.msra.mxu0 0.0
    %134 = vmatprep.subr.mxu0 0.0
    %135 = vmatpush1.msra.mxu0 0.0
    %136 = vmatprep.subr.mxu0 0.0
    %137 = vmatpush1.msra.mxu0 0.0
    %138 = vmatprep.subr.mxu0 0.0
    %139 = vmatpush1.msra.mxu0 0.0
    %140 = vmatprep.subr.mxu0 0.0
    %141 = vmatpush1.msra.mxu0 0.0
    %142 = vmatprep.subr.mxu0 0.0
    %143 = vmatpush1.msra.mxu0 0.0
    %144 = vmatprep.subr.mxu0 0.0
    %145 = vmatpush1.msra.mxu0 0.0
    %146 = vmatprep.subr.mxu0 0.0
    %147 = vmatpush1.msra.mxu0 0.0
    %148 = vmatprep.mubr.f32.mxu0 0.0
    %149 = vmatmul.mubr.f32.gmra.mrb[0].mxu0 %v37
    %v150 = vpop.f32.mrb[0].mxu0
    %v151 = vadd.f32 0.0, %v150
    %v152 = vpop.f32.mrb[0].mxu0
    %153 = vmatprep.mubr.f32.mxu0 0.0
    %154 = vmatmul.mubr.f32.gmra.mrb[0].mxu0 %v40
    %v155 = vpop.f32.mrb[0].mxu0
    %v156 = vadd.f32 0.0, %v155
    %v157 = vpop.f32.mrb[0].mxu0
    %158 = vmatprep.mubr.f32.mxu0 0.0
    %159 = vmatmul.mubr.f32.gmra.mrb[0].mxu0 %v43
    %v160 = vpop.f32.mrb[0].mxu0
    %v161 = vadd.f32 0.0, %v160
    %v162 = vpop.f32.mrb[0].mxu0
    %163 = vmatprep.mubr.f32.mxu0 0.0
    %164 = vmatmul.mubr.f32.gmra.mrb[0].mxu0 %v46
    %v165 = vpop.f32.mrb[0].mxu0
    %v166 = vadd.f32 0.0, %v165
    %v167 = vpop.f32.mrb[0].mxu0
    %168 = vmatprep.mubr.f32.mxu0 0.0
    %169 = vmatmul.mubr.f32.gmra.mrb[0].mxu0 %v49
    %v170 = vpop.f32.mrb[0].mxu0
    %v171 = vadd.f32 0.0, %v170
    %v172 = vpop.f32.mrb[0].mxu0
    %173 = vmatprep.mubr.f32.mxu0 0.0
    %174 = vmatmul.mubr.f32.gmra.mrb[0].mxu0 %v52
    %v175 = vpop.f32.mrb[0].mxu0
    %v176 = vadd.f32 0.0, %v175
    %v177 = vpop.f32.mrb[0].mxu0
    %178 = vmatprep.mubr.f32.mxu0 0.0
    %179 = vmatmul.mubr.f32.gmra.mrb[0].mxu0 %v55
    %v180 = vpop.f32.mrb[0].mxu0
    %v181 = vadd.f32 0.0, %v180
    %v182 = vpop.f32.mrb[0].mxu0
    %183 = vmatprep.mubr.f32.mxu0 0.0
    %184 = vmatmul.mubr.f32.gmra.mrb[0].mxu0 %v58
    %v185 = vpop.f32.mrb[0].mxu0
    %v186 = vadd.f32 0.0, %v185
    %v187 = vpop.f32.mrb[0].mxu0
    %188 = vmatprep.mubr.f32.mxu0 0.0
    %189 = vmatmul.mubr.f32.gmra.mrb[0].mxu0 %v61
    %v190 = vpop.f32.mrb[0].mxu0
    %v191 = vadd.f32 0.0, %v190
    %v192 = vpop.f32.mrb[0].mxu0
    %193 = vmatprep.mubr.f32.mxu0 0.0
    %194 = vmatmul.mubr.f32.gmra.mrb[0].mxu0 %v64
    %v195 = vpop.f32.mrb[0].mxu0
    %v196 = vadd.f32 0.0, %v195
    %v197 = vpop.f32.mrb[0].mxu0
    %198 = vmatprep.mubr.f32.mxu0 0.0
    %199 = vmatmul.mubr.f32.gmra.mrb[0].mxu0 %v67
    %v200 = vpop.f32.mrb[0].mxu0
    %v201 = vadd.f32 0.0, %v200
    %v202 = vpop.f32.mrb[0].mxu0
    %203 = vmatprep.mubr.f32.mxu0 0.0
    %204 = vmatmul.mubr.f32.gmra.mrb[0].mxu0 %v70
    %v205 = vpop.f32.mrb[0].mxu0
    %v206 = vadd.f32 0.0, %v205
    %v207 = vpop.f32.mrb[0].mxu0
    %208 = vmatprep.mubr.f32.mxu0 0.0
    %209 = vmatmul.mubr.f32.gmra.mrb[0].mxu0 %v73
    %v210 = vpop.f32.mrb[0].mxu0
    %v211 = vadd.f32 0.0, %v210
    %v212 = vpop.f32.mrb[0].mxu0
    %213 = vmatprep.mubr.f32.mxu0 0.0
    %214 = vmatmul.mubr.f32.gmra.mrb[0].mxu0 %v76
    %v215 = vpop.f32.mrb[0].mxu0
    %v216 = vadd.f32 0.0, %v215
    %v217 = vpop.f32.mrb[0].mxu0
    %218 = vmatprep.mubr.f32.mxu0 0.0
    %219 = vmatmul.mubr.f32.gmra.mrb[0].mxu0 %v79
    %v220 = vpop.f32.mrb[0].mxu0
    %v221 = vadd.f32 0.0, %v220
    %v222 = vpop.f32.mrb[0].mxu0
    %223 = vmatprep.mubr.f32.mxu0 0.0
    %224 = vmatmul.mubr.f32.gmra.mrb[0].mxu0 %v82
    %v225 = vpop.f32.mrb[0].mxu0
    %v226 = vadd.f32 0.0, %v225
    %v227 = vpop.f32.mrb[0].mxu0
    %228 = vdwg.mxu0
    %v229 = vld [vmem:[%s2] sm:$0xff]
    %v230 = vld [vmem:[%s2 + $0x8] sm:$0xff]
    %v231 = vld [vmem:[%s2 + $0x10] sm:$0xff]
    %v232 = vld [vmem:[%s2 + $0x18] sm:$0xff]
    %v233 = vld [vmem:[%s2 + $0x20] sm:$0xff]
    %v234 = vld [vmem:[%s2 + $0x28] sm:$0xff]
    %v235 = vld [vmem:[%s2 + $0x30] sm:$0xff]
    %v236 = vld [vmem:[%s2 + $0x38] sm:$0xff]
    %v237 = vld [vmem:[%s2 + $0x40] sm:$0xff]
    %v238 = vld [vmem:[%s2 + $0x48] sm:$0xff]
    %v239 = vld [vmem:[%s2 + $0x50] sm:$0xff]
    %v240 = vld [vmem:[%s2 + $0x58] sm:$0xff]
    %v241 = vld [vmem:[%s2 + $0x60] sm:$0xff]
    %v242 = vld [vmem:[%s2 + $0x68] sm:$0xff]
    %v243 = vld [vmem:[%s2 + $0x70] sm:$0xff]
    %v244 = vld [vmem:[%s2 + $0x78] sm:$0xff]
    %245 = vmatprep.subr.mxu0 0.0
    %246 = vmatpush1.msra.mxu0 %v229
    %247 = vmatprep.subr.mxu0 0.0
    %248 = vmatpush1.msra.mxu0 %v230
    %249 = vmatprep.subr.mxu0 0.0
    %250 = vmatpush1.msra.mxu0 %v231
    %251 = vmatprep.subr.mxu0 0.0
    %252 = vmatpush1.msra.mxu0 %v232
    %253 = vmatprep.subr.mxu0 0.0
    %254 = vmatpush1.msra.mxu0 %v233
    %255 = vmatprep.subr.mxu0 0.0
    %256 = vmatpush1.msra.mxu0 %v234
    %257 = vmatprep.subr.mxu0 0.0
    %258 = vmatpush1.msra.mxu0 %v235
    %259 = vmatprep.subr.mxu0 0.0
    %260 = vmatpush1.msra.mxu0 %v236
    %261 = vmatprep.subr.mxu0 0.0
    %262 = vmatpush1.msra.mxu0 %v237
    %263 = vmatprep.subr.mxu0 0.0
    %264 = vmatpush1.msra.mxu0 %v238
    %265 = vmatprep.subr.mxu0 0.0
    %266 = vmatpush1.msra.mxu0 %v239
    %267 = vmatprep.subr.mxu0 0.0
    %268 = vmatpush1.msra.mxu0 %v240
    %269 = vmatprep.subr.mxu0 0.0
    %270 = vmatpush1.msra.mxu0 %v241
    %271 = vmatprep.subr.mxu0 0.0
    %272 = vmatpush1.msra.mxu0 %v242
    %273 = vmatprep.subr.mxu0 0.0
    %274 = vmatpush1.msra.mxu0 %v243
    %275 = vmatprep.subr.mxu0 0.0
    %276 = vmatpush1.msra.mxu0 %v244
    %277 = vmatprep.subr.mxu0 0.0
    %278 = vmatpush1.msra.mxu0 0.0
    %279 = vmatprep.subr.mxu0 0.0
    %280 = vmatpush1.msra.mxu0 0.0
    %281 = vmatprep.subr.mxu0 0.0
    %282 = vmatpush1.msra.mxu0 0.0
    %283 = vmatprep.subr.mxu0 0.0
    %284 = vmatpush1.msra.mxu0 0.0
    %285 = vmatprep.subr.mxu0 0.0
    %286 = vmatpush1.msra.mxu0 0.0
    %287 = vmatprep.subr.mxu0 0.0
    %288 = vmatpush1.msra.mxu0 0.0
    %289 = vmatprep.subr.mxu0 0.0
    %290 = vmatpush1.msra.mxu0 0.0
    %291 = vmatprep.subr.mxu0 0.0
    %292 = vmatpush1.msra.mxu0 0.0
    %293 = vmatprep.subr.mxu0 0.0
    %294 = vmatpush1.msra.mxu0 0.0
    %295 = vmatprep.subr.mxu0 0.0
    %296 = vmatpush1.msra.mxu0 0.0
    %297 = vmatprep.subr.mxu0 0.0
    %298 = vmatpush1.msra.mxu0 0.0
    %299 = vmatprep.subr.mxu0 0.0
    %300 = vmatpush1.msra.mxu0 0.0
    %301 = vmatprep.subr.mxu0 0.0
    %302 = vmatpush1.msra.mxu0 0.0
    %303 = vmatprep.subr.mxu0 0.0
    %304 = vmatpush1.msra.mxu0 0.0
    %305 = vmatprep.subr.mxu0 0.0
    %306 = vmatpush1.msra.mxu0 0.0
    %307 = vmatprep.subr.mxu0 0.0
    %308 = vmatpush1.msra.mxu0 0.0
    %309 = vmatprep.mubr.f32.mxu0 0.0
    %310 = vmatmul.mubr.f32.gmra.mrb[0].mxu0 %v151
    %v311 = vpop.f32.mrb[0].mxu0
    %v312 = vadd.f32 0.0, %v311
    %v313 = vpop.f32.mrb[0].mxu0
    %314 = vmatprep.mubr.f32.mxu0 0.0
    %315 = vmatmul.mubr.f32.gmra.mrb[0].mxu0 %v156
    %v316 = vpop.f32.mrb[0].mxu0
    %v317 = vadd.f32 0.0, %v316
    %v318 = vpop.f32.mrb[0].mxu0
    %319 = vmatprep.mubr.f32.mxu0 0.0
    %320 = vmatmul.mubr.f32.gmra.mrb[0].mxu0 %v161
    %v321 = vpop.f32.mrb[0].mxu0
    %v322 = vadd.f32 0.0, %v321
    %v323 = vpop.f32.mrb[0].mxu0
    %324 = vmatprep.mubr.f32.mxu0 0.0
    %325 = vmatmul.mubr.f32.gmra.mrb[0].mxu0 %v166
    %v326 = vpop.f32.mrb[0].mxu0
    %v327 = vadd.f32 0.0, %v326
    %v328 = vpop.f32.mrb[0].mxu0
    %329 = vmatprep.mubr.f32.mxu0 0.0
    %330 = vmatmul.mubr.f32.gmra.mrb[0].mxu0 %v171
    %v331 = vpop.f32.mrb[0].mxu0
    %v332 = vadd.f32 0.0, %v331
    %v333 = vpop.f32.mrb[0].mxu0
    %334 = vmatprep.mubr.f32.mxu0 0.0
    %335 = vmatmul.mubr.f32.gmra.mrb[0].mxu0 %v176
    %v336 = vpop.f32.mrb[0].mxu0
    %v337 = vadd.f32 0.0, %v336
    %v338 = vpop.f32.mrb[0].mxu0
    %339 = vmatprep.mubr.f32.mxu0 0.0
    %340 = vmatmul.mubr.f32.gmra.mrb[0].mxu0 %v181
    %v341 = vpop.f32.mrb[0].mxu0
    %v342 = vadd.f32 0.0, %v341
    %v343 = vpop.f32.mrb[0].mxu0
    %344 = vmatprep.mubr.f32.mxu0 0.0
    %345 = vmatmul.mubr.f32.gmra.mrb[0].mxu0 %v186
    %v346 = vpop.f32.mrb[0].mxu0
    %v347 = vadd.f32 0.0, %v346
    %v348 = vpop.f32.mrb[0].mxu0
    %349 = vmatprep.mubr.f32.mxu0 0.0
    %350 = vmatmul.mubr.f32.gmra.mrb[0].mxu0 %v191
    %v351 = vpop.f32.mrb[0].mxu0
    %v352 = vadd.f32 0.0, %v351
    %v353 = vpop.f32.mrb[0].mxu0
    %354 = vmatprep.mubr.f32.mxu0 0.0
    %355 = vmatmul.mubr.f32.gmra.mrb[0].mxu0 %v196
    %v356 = vpop.f32.mrb[0].mxu0
    %v357 = vadd.f32 0.0, %v356
    %v358 = vpop.f32.mrb[0].mxu0
    %359 = vmatprep.mubr.f32.mxu0 0.0
    %360 = vmatmul.mubr.f32.gmra.mrb[0].mxu0 %v201
    %v361 = vpop.f32.mrb[0].mxu0
    %v362 = vadd.f32 0.0, %v361
    %v363 = vpop.f32.mrb[0].mxu0
    %364 = vmatprep.mubr.f32.mxu0 0.0
    %365 = vmatmul.mubr.f32.gmra.mrb[0].mxu0 %v206
    %v366 = vpop.f32.mrb[0].mxu0
    %v367 = vadd.f32 0.0, %v366
    %v368 = vpop.f32.mrb[0].mxu0
    %369 = vmatprep.mubr.f32.mxu0 0.0
    %370 = vmatmul.mubr.f32.gmra.mrb[0].mxu0 %v211
    %v371 = vpop.f32.mrb[0].mxu0
    %v372 = vadd.f32 0.0, %v371
    %v373 = vpop.f32.mrb[0].mxu0
    %374 = vmatprep.mubr.f32.mxu0 0.0
    %375 = vmatmul.mubr.f32.gmra.mrb[0].mxu0 %v216
    %v376 = vpop.f32.mrb[0].mxu0
    %v377 = vadd.f32 0.0, %v376
    %v378 = vpop.f32.mrb[0].mxu0
    %379 = vmatprep.mubr.f32.mxu0 0.0
    %380 = vmatmul.mubr.f32.gmra.mrb[0].mxu0 %v221
    %v381 = vpop.f32.mrb[0].mxu0
    %v382 = vadd.f32 0.0, %v381
    %v383 = vpop.f32.mrb[0].mxu0
    %384 = vmatprep.mubr.f32.mxu0 0.0
    %385 = vmatmul.mubr.f32.gmra.mrb[0].mxu0 %v226
    %v386 = vpop.f32.mrb[0].mxu0
    %v387 = vadd.f32 0.0, %v386
    %v388 = vpop.f32.mrb[0].mxu0
    %389 = vdwg.mxu0
    %vm390 = vcmask 64512
    %391 = vst.msk [vmem:[%s4] sm:$0xff] %vm390, %v312
    %392 = vst.msk [vmem:[%s4 + $0x8] sm:$0xff] %vm390, %v317
    %393 = vst.msk [vmem:[%s4 + $0x10] sm:$0xff] %vm390, %v322
    %394 = vst.msk [vmem:[%s4 + $0x18] sm:$0xff] %vm390, %v327
    %395 = vst.msk [vmem:[%s4 + $0x20] sm:$0xff] %vm390, %v332
    %396 = vst.msk [vmem:[%s4 + $0x28] sm:$0xff] %vm390, %v337
    %397 = vst.msk [vmem:[%s4 + $0x30] sm:$0xff] %vm390, %v342
    %398 = vst.msk [vmem:[%s4 + $0x38] sm:$0xff] %vm390, %v347
    %399 = vst.msk [vmem:[%s4 + $0x40] sm:$0xff] %vm390, %v352
    %400 = vst.msk [vmem:[%s4 + $0x48] sm:$0xff] %vm390, %v357
    %401 = vst.msk [vmem:[%s4 + $0x50] sm:$0xff] %vm390, %v362
    %402 = vst.msk [vmem:[%s4 + $0x58] sm:$0xff] %vm390, %v367
    %403 = vst.msk [vmem:[%s4 + $0x60] sm:$0xff] %vm390, %v372
    %404 = vst.msk [vmem:[%s4 + $0x68] sm:$0xff] %vm390, %v377
    %405 = vst.msk [vmem:[%s4 + $0x70] sm:$0xff] %vm390, %v382
    %406 = vst.msk [vmem:[%s4 + $0x78] sm:$0xff] %vm390, %v387
    %v407 = vpack.c.bf16 %v156, %v151
    %v408 = vpack.c.bf16 %v166, %v161
    %v409 = vpack.c.bf16 %v176, %v171
    %v410 = vpack.c.bf16 %v186, %v181
    %v411 = vpack.c.bf16 %v196, %v191
    %v412 = vpack.c.bf16 %v206, %v201
    %v413 = vpack.c.bf16 %v216, %v211
    %v414 = vpack.c.bf16 %v226, %v221
    %v423 = vunpack.c.l.b16 %v407
    %v424 = vunpack.c.h.b16 %v407
    %v425 = vunpack.c.l.b16 %v408
    %v426 = vunpack.c.h.b16 %v408
    %v427 = vunpack.c.l.b16 %v409
    %v428 = vunpack.c.h.b16 %v409
    %v429 = vunpack.c.l.b16 %v410
    %v430 = vunpack.c.h.b16 %v410
    %v431 = vunpack.c.l.b16 %v411
    %v432 = vunpack.c.h.b16 %v411
    %v433 = vunpack.c.l.b16 %v412
    %v434 = vunpack.c.h.b16 %v412
    %v435 = vunpack.c.l.b16 %v413
    %v436 = vunpack.c.h.b16 %v413
    %v437 = vunpack.c.l.b16 %v414
    %v438 = vunpack.c.h.b16 %v414
    %v439 = vpack.c.b16 %v423, %v423
    %v440 = vpack.c.b16 %v424, %v424
    %v441 = vpack.c.b16 %v425, %v425
    %v442 = vpack.c.b16 %v426, %v426
    %v443 = vpack.c.b16 %v427, %v427
    %v444 = vpack.c.b16 %v428, %v428
    %v445 = vpack.c.b16 %v429, %v429
    %v446 = vpack.c.b16 %v430, %v430
    %v447 = vpack.c.b16 %v431, %v431
    %v448 = vpack.c.b16 %v432, %v432
    %v449 = vpack.c.b16 %v433, %v433
    %v450 = vpack.c.b16 %v434, %v434
    %v451 = vpack.c.b16 %v435, %v435
    %v452 = vpack.c.b16 %v436, %v436
    %v453 = vpack.c.b16 %v437, %v437
    %v454 = vpack.c.b16 %v438, %v438
    %471 = vst [vmem:[#allocation2] sm:$0xf] %v439
    %472 = vst [vmem:[#allocation2 + $0x4] sm:$0xf] %v440
    %473 = vst [vmem:[#allocation2 + $0x8] sm:$0xf] %v441
    %474 = vst [vmem:[#allocation2 + $0xc] sm:$0xf] %v442
    %475 = vst [vmem:[#allocation2 + $0x10] sm:$0xf] %v443
    %476 = vst [vmem:[#allocation2 + $0x14] sm:$0xf] %v444
    %477 = vst [vmem:[#allocation2 + $0x18] sm:$0xf] %v445
    %478 = vst [vmem:[#allocation2 + $0x1c] sm:$0xf] %v446
    %479 = vst [vmem:[#allocation2 + $0x20] sm:$0xf] %v447
    %480 = vst [vmem:[#allocation2 + $0x24] sm:$0xf] %v448
    %481 = vst [vmem:[#allocation2 + $0x28] sm:$0xf] %v449
    %482 = vst [vmem:[#allocation2 + $0x2c] sm:$0xf] %v450
    %483 = vst [vmem:[#allocation2 + $0x30] sm:$0xf] %v451
    %484 = vst [vmem:[#allocation2 + $0x34] sm:$0xf] %v452
    %485 = vst [vmem:[#allocation2 + $0x38] sm:$0xf] %v453
    %486 = vst [vmem:[#allocation2 + $0x3c] sm:$0xf] %v454
    // Predicated region
    $region14: #{tpu_custom_call.1} parent=1 // pred_check
      _
    $region15: #{tpu_custom_call.1} parent=1 // pred_check_branch
      %488 = sbr.rel (0) target = $region17
    $region16: #{tpu_custom_call.1} parent=1 // pred_region
      %s490 = ssub.s32 1024, 1024
      %491 = vsyncadd [#allocation3], %s490
      %s492 = sshll.u32 [#allocation2], 4
      %s493 = int_to_ptr.vmem [resolvable:$true] %s492
      %498 = dma.vmem_to_hbm [thread:$0]  %s493, 1024, %s3, [#allocation3], 64, 64, 4
    $region17: #{tpu_custom_call.1} parent=1 // pred_fallthru
      _
    // Predicated region
    $region18: #{tpu_custom_call.1} parent=1 // pred_check
      _
    $region19: #{tpu_custom_call.1} parent=1 // pred_check_branch
      %500 = sbr.rel (0) target = $region21
    $region20: #{tpu_custom_call.1} parent=1 // pred_region
      _
    $region21: #{tpu_custom_call.1} parent=1 // pred_fallthru
      _
    // Predicated region
    $region22: #{tpu_custom_call.1} parent=1 // pred_check
      _
    $region23: #{tpu_custom_call.1} parent=1 // pred_check_branch
      %502 = sbr.rel (0) target = $region25
    $region24: #{tpu_custom_call.1} parent=1 // pred_region
      %503 = dma.done [#allocation3], 1024
    $region25: #{tpu_custom_call.1} parent=1 // pred_fallthru
      _
    // Predicated region
    $region26: #{tpu_custom_call.1} parent=1 // pred_check
      _
    $region27: #{tpu_custom_call.1} parent=1 // pred_check_branch
      %505 = sbr.rel (0) target = $region29
    $region28: #{tpu_custom_call.1} parent=1 // pred_region
      _
    $region29: #{tpu_custom_call.1} parent=1 // pred_fallthru
      _
    %506 = vsyncpa [#allocation3], 1

</llo_original>
